<compile_context>
chip_gen: v5e
topology: v5e:2x2
jax: 0.10.0
libtpu: 0.0.40
codegen_flags: <defaults>
</compile_context>

<pallas_src>
import jax
import jax.numpy as jnp
from jax.experimental import pallas as pl
from jax.experimental.pallas import tpu as pltpu


def _round_up(x, m):
    return ((x + m - 1) // m) * m


def _ncf_kernel(ids_ref, iota_ref, table_ref, out_ref):
    """One batch tile.

    ids_ref   : int32 [2, TB]   row 0 = user ids, row 1 = item ids + Vu_pad
    iota_ref  : int32 [Vp, 1]   resident iota column (hoisted out of the body)
    table_ref : f32  [32, Vp]   fused tower table: rows 0:10 user, 16:26 item
    out_ref   : f32  [1, TB]    sigmoid(user_out . item_out), lane-dense
    """
    uid = ids_ref[0:1, :]                                   # [1, TB] int32
    iid = ids_ref[1:2, :]                                   # [1, TB] int32
    iota = iota_ref[...]                                    # [Vp, 1] int32

    # Single one-hot with (up to) two ones per column: one for the user row,
    # one for the (offset) item row.  Compare + OR + cast only; the iota is
    # resident, not regenerated per tile.
    hit = jnp.logical_or(iota == uid, iota == iid)          # [Vp, TB] bool
    oh = hit.astype(jnp.float32)                            # [Vp, TB] f32

    # One MXU push: [32, Vp] x [Vp, TB] -> [32, TB].
    # Rows 0:10 = user tower output, rows 16:26 = item tower output,
    # all other rows are exactly zero by construction of the fused table.
    t = jnp.dot(table_ref[...], oh, preferred_element_type=jnp.float32)

    u_t = t[0:16, :]                                        # sublane-aligned
    i_t = t[16:32, :]                                       # sublane-aligned
    # Padding rows (10:16 of u_t / i_t) are zero, so they add nothing.
    dot = jnp.sum(u_t * i_t, axis=0, keepdims=True)         # [1, TB]
    out_ref[...] = jax.nn.sigmoid(dot)


def neural_cf_dot_product(sparse_feature, params, *, tb=4096):
    """Forward pass of NeuralCFDotProduct.

    sparse_feature: int32 [B, 2] (or [2] -> batch of 1); col 0 user, col 1 item.
    params:         dict of embedding tables + linear weights/biases.
    returns:        float32 [B] (scalar if B == 1), matching torch .squeeze().
    """
    if sparse_feature.ndim == 1:
        sparse_feature = sparse_feature.reshape(1, -1)
    B = sparse_feature.shape[0]

    # ---- parameter folding (exact linear algebra on parameter-only tensors) ----
    wu = params["wu1"] @ params["wu2"]                       # [du, 10]
    bu = params["bu1"] @ params["wu2"] + params["bu2"]       # [1, 10]
    wi = params["wi1"] @ params["wi2"]                       # [di, 10]
    bi = params["bi1"] @ params["wi2"] + params["bi2"]       # [1, 10]
    tu_t = (params["emb_user"] @ wu + bu).T.astype(jnp.float32)   # [10, Vu]
    ti_t = (params["emb_item"] @ wi + bi).T.astype(jnp.float32)   # [10, Vi]

    vu, vi = tu_t.shape[1], ti_t.shape[1]
    vu_p = _round_up(vu, 8)                                  # sublane-aligned
    vi_p = _round_up(vi, 8)
    vp = vu_p + vi_p

    # This design keeps the folded tables and the [Vp, TB] one-hot resident in
    # VMEM, so it only scales to small vocabularies.
    # TODO(synk): add a scalar-prefetch / DMA-gather fallback for large vocabs.
    assert vp <= 4096, "one-hot gather path only supports tiny vocabularies"

    # Fused tower table [32, Vp]: user rows 0:10 over cols 0:Vu, item rows
    # 16:26 over cols Vu_p:Vu_p+Vi, zeros elsewhere (keeps post-matmul slices
    # aligned to 16-sublane groups).
    table = jnp.zeros((32, vp), jnp.float32)
    table = table.at[0:10, 0:vu].set(tu_t)
    table = table.at[16:26, vu_p:vu_p + vi].set(ti_t)

    iota_col = jnp.arange(vp, dtype=jnp.int32).reshape(vp, 1)

    # ---- batch tiling: batch on the 128-lane axis ----
    b_pad128 = _round_up(B, 128)
    tb = max(128, (min(tb, b_pad128) // 128) * 128)          # multiple of 128
    # Keep at least 2 grid steps when the batch allows it so the "parallel"
    # axis can shard across v7x's two TensorCores (harmless on v5e/v6e).
    if b_pad128 >= 256 and _round_up(B, tb) // tb < 2:
        tb = max(128, (b_pad128 // 2 // 128) * 128)
    b_pad = _round_up(B, tb)
    grid_n = b_pad // tb

    uid = sparse_feature[:, 0].astype(jnp.int32)
    iid = sparse_feature[:, 1].astype(jnp.int32) + vu_p      # pre-offset items
    ids = jnp.stack([uid, iid], axis=0)                      # [2, B]
    ids = jnp.pad(ids, ((0, 0), (0, b_pad - B)), constant_values=-1)

    cost = pl.CostEstimate(
        flops=int(2 * 32 * vp * b_pad      # fused one-hot matmul
                  + 2 * vp * b_pad         # one-hot compare/select (VPU)
                  + 3 * 16 * b_pad),       # elementwise dot + reduce
        transcendentals=int(b_pad),
        bytes_accessed=int(ids.size * 4 + table.size * 4
                           + iota_col.size * 4 + b_pad * 4),
    )

    out = pl.pallas_call(
        _ncf_kernel,
        out_shape=jax.ShapeDtypeStruct((1, b_pad), jnp.float32),
        grid=(grid_n,),
        in_specs=[
            pl.BlockSpec((2, tb), lambda i: (0, i)),         # ids, batch-tiled
            pl.BlockSpec((vp, 1), lambda i: (0, 0)),         # resident iota
            pl.BlockSpec((32, vp), lambda i: (0, 0)),        # resident table
        ],
        out_specs=pl.BlockSpec((1, tb), lambda i: (0, i)),   # lane-dense out
        compiler_params=pltpu.CompilerParams(
            dimension_semantics=("parallel",),               # v7x dual-TC
            vmem_limit_bytes=32 * 1024 * 1024),              # covers v5e default
        cost_estimate=cost,
    )(ids, iota_col, table)

    return jnp.squeeze(out[0, :B])


def init_params(key, sparse_col_size):
    emb_sizes = [int(6 * pow(c, 0.25)) for c in sparse_col_size]
    du, di = emb_sizes[0], emb_sizes[1]
    ks = jax.random.split(key, 6)

    def lin(k, fan_in, fan_out):
        kw, kb = jax.random.split(k)
        bound = 1.0 / (fan_in ** 0.5)
        w = jax.random.uniform(kw, (fan_in, fan_out), jnp.float32, -bound, bound)
        b = jax.random.uniform(kb, (1, fan_out), jnp.float32, -bound, bound)
        return w, b

    wu1, bu1 = lin(ks[2], du, 10)
    wu2, bu2 = lin(ks[3], 10, 10)
    wi1, bi1 = lin(ks[4], di, 10)
    wi2, bi2 = lin(ks[5], 10, 10)

    return {
        "emb_user": jax.random.normal(ks[0], (sparse_col_size[0], du), jnp.float32),
        "emb_item": jax.random.normal(ks[1], (sparse_col_size[1], di), jnp.float32),
        "wu1": wu1, "bu1": bu1, "wu2": wu2, "bu2": bu2,
        "wi1": wi1, "bi1": bi1, "wi2": wi2, "bi2": bi2,
    }


if __name__ == "__main__":
    key = jax.random.PRNGKey(0)
    sparse_col_size = [100, 50]          # user vocab, item vocab
    params = init_params(key, sparse_col_size)

    B = 8
    k_u, k_i = jax.random.split(jax.random.PRNGKey(0))
    user_ids = jax.random.randint(k_u, (B, 1), 0, sparse_col_size[0], jnp.int32)
    item_ids = jax.random.randint(k_i, (B, 1), 0, sparse_col_size[1], jnp.int32)
    sparse_feature = jnp.concatenate([user_ids, item_ids], axis=1)   # [B, 2]

    out = neural_cf_dot_product(sparse_feature, params)
    out = jax.block_until_ready(out)

    # Plain-JAX unfused reference (mirrors the PyTorch forward exactly).
    ue = jnp.take(params["emb_user"], sparse_feature[:, 0], axis=0)
    ie = jnp.take(params["emb_item"], sparse_feature[:, 1], axis=0)
    u = (ue @ params["wu1"] + params["bu1"]) @ params["wu2"] + params["bu2"]
    it = (ie @ params["wi1"] + params["bi1"]) @ params["wi2"] + params["bi2"]
    ref = jax.nn.sigmoid(jnp.sum(u * it, axis=-1))

    assert out.shape == (B,), out.shape
    assert jnp.allclose(out, ref, atol=1e-5, rtol=1e-5), (out, ref)

    print("KERNEL_OK")
</pallas_src>

<mosaic_0001>
module attributes {stable_mosaic.version = 11 : i64} {
  func.func @_ncf_kernel(%arg0: i32, %arg1: memref<2x128xi32, #tpu.memory_space<vmem>>, %arg2: memref<160x1xi32, #tpu.memory_space<vmem>>, %arg3: memref<32x160xf32, #tpu.memory_space<vmem>>, %arg4: memref<1x128xf32, #tpu.memory_space<vmem>>) attributes {dimension_semantics = [#tpu.dimension_semantics<parallel>], iteration_bounds = array<i64: 1>, scalar_prefetch = 0 : i64, scratch_operands = 0 : i64, tpu.core_type = #tpu.core_type<tc>, window_params = [{transform_indices = @transform_0, window_bounds = array<i64: 2, 128>}, {pipeline_mode = #tpu.pipeline_mode<synchronous>, transform_indices = @transform_1, window_bounds = array<i64: 160, 1>}, {pipeline_mode = #tpu.pipeline_mode<synchronous>, transform_indices = @transform_2, window_bounds = array<i64: 32, 160>}, {transform_indices = @transform_3, window_bounds = array<i64: 1, 128>}]} {
    %c0 = arith.constant 0 : index
    %c0_0 = arith.constant 0 : index
    %0 = vector.load %arg1[%c0, %c0_0] : memref<2x128xi32, #tpu.memory_space<vmem>>, vector<1x128xi32>
    %c1 = arith.constant 1 : index
    %c0_1 = arith.constant 0 : index
    %1 = vector.load %arg1[%c1, %c0_1] : memref<2x128xi32, #tpu.memory_space<vmem>>, vector<1x128xi32>
    %c0_2 = arith.constant 0 : index
    %c0_3 = arith.constant 0 : index
    %2 = vector.load %arg2[%c0_2, %c0_3] : memref<160x1xi32, #tpu.memory_space<vmem>>, vector<160x1xi32>
    %3 = vector.broadcast %2 : vector<160x1xi32> to vector<160x128xi32>
    %4 = vector.broadcast %0 : vector<1x128xi32> to vector<160x128xi32>
    %5 = arith.cmpi eq, %3, %4 : vector<160x128xi32>
    %6 = vector.broadcast %2 : vector<160x1xi32> to vector<160x128xi32>
    %7 = vector.broadcast %1 : vector<1x128xi32> to vector<160x128xi32>
    %8 = arith.cmpi eq, %6, %7 : vector<160x128xi32>
    %9 = arith.ori %5, %8 : vector<160x128xi1>
    %10 = arith.extui %9 : vector<160x128xi1> to vector<160x128xi32>
    %11 = arith.sitofp %10 : vector<160x128xi32> to vector<160x128xf32>
    %c0_4 = arith.constant 0 : index
    %c0_5 = arith.constant 0 : index
    %12 = vector.load %arg3[%c0_4, %c0_5] : memref<32x160xf32, #tpu.memory_space<vmem>>, vector<32x160xf32>
    %cst = arith.constant dense<0.000000e+00> : vector<32x128xf32>
    %13 = tpu.matmul %12, %11, %cst {dimension_numbers = #tpu.dot_dimension_numbers<[1], [0], [0], [1], [0, 0, 1, 1], [], []>} : vector<32x160xf32>, vector<160x128xf32>, vector<32x128xf32> -> vector<32x128xf32>
    %14 = vector.extract_strided_slice %13 {offsets = [0, 0], sizes = [16, 128], strides = [1, 1]} : vector<32x128xf32> to vector<16x128xf32>
    %15 = vector.extract_strided_slice %13 {offsets = [16, 0], sizes = [16, 128], strides = [1, 1]} : vector<32x128xf32> to vector<16x128xf32>
    %16 = arith.mulf %14, %15 : vector<16x128xf32>
    %cst_6 = arith.constant dense<0.000000e+00> : vector<128xf32>
    %17 = vector.multi_reduction <add>, %16, %cst_6 [0] : vector<16x128xf32> to vector<128xf32>
    %18 = vector.shape_cast %17 : vector<128xf32> to vector<1x128xf32>
    %19 = arith.negf %18 : vector<1x128xf32>
    %20 = math.exp %19 : vector<1x128xf32>
    %cst_7 = arith.constant 1.000000e+00 : f32
    %21 = vector.broadcast %cst_7 : f32 to vector<1x128xf32>
    %22 = arith.addf %21, %20 : vector<1x128xf32>
    %23 = arith.divf %21, %22 : vector<1x128xf32>
    %c0_8 = arith.constant 0 : index
    %c0_9 = arith.constant 0 : index
    %24 = vector.load %arg4[%c0_8, %c0_9] : memref<1x128xf32, #tpu.memory_space<vmem>>, vector<1x128xf32>
    tpu.vector_store %arg4[%c0_8, %c0_9], %23 {strides = array<i32>} : memref<1x128xf32, #tpu.memory_space<vmem>>, vector<1x128xf32>,
    return
  }
  func.func @transform_0(%arg0: i32) -> (i32, i32) {
    %c0_i32 = arith.constant 0 : i32
    %c0_i32_0 = arith.constant 0 : i32
    return %c0_i32, %arg0 : i32, i32
  }
  func.func @transform_1(%arg0: i32) -> (i32, i32) {
    %c0_i32 = arith.constant 0 : i32
    %c0_i32_0 = arith.constant 0 : i32
    %c0_i32_1 = arith.constant 0 : i32
    return %c0_i32, %c0_i32_0 : i32, i32
  }
  func.func @transform_2(%arg0: i32) -> (i32, i32) {
    %c0_i32 = arith.constant 0 : i32
    %c0_i32_0 = arith.constant 0 : i32
    %c0_i32_1 = arith.constant 0 : i32
    return %c0_i32, %c0_i32_0 : i32, i32
  }
  func.func @transform_3(%arg0: i32) -> (i32, i32) {
    %c0_i32 = arith.constant 0 : i32
    %c0_i32_0 = arith.constant 0 : i32
    return %c0_i32, %arg0 : i32, i32
  }
}

</mosaic_0001>

<llo_original>
// kernel: tpu_custom_call.1
$region0: #{tpu_custom_call.1}
  #allocation0 [shape = 'u32[]', space=smem, size = 0x4, offset = 0x4, fixed_abs, tag = 'smem constant byte address 0x4 - core index']
  #allocation1 [shape = 'u32[72,128]{1,0:T(1,128)}', space=vmem, size = 0x9000, scoped, tag = 'internal scratch']
  %s0 = inlined_call_operand.vmem [shape: s32[2,128], index: 0, kind: input, shape index: {}]
  %s1 = inlined_call_operand.vmem [shape: s32[160,1], index: 1, kind: input, shape index: {}]
  %s2 = inlined_call_operand.vmem [shape: f32[32,160], index: 2, kind: input, shape index: {}]
  %s3 = inlined_call_operand.hbm [shape: f32[1,128], index: 3, kind: output, shape index: {}]
  %s4 = sld [smem:[#allocation0]]
  $region22: #{tpu_custom_call.1} parent=0
    _
  %s6 = ssub.s32 1, %s4
  %s7 = scalar_select 0, %s6, %s4
  $region1: #{tpu_custom_call.1} parent=0
    #allocation2 [shape = 'u8[512]{0}', space=vmem, size = 0x400, scoped, tag = 'output window, operand 0, single buffered']
    #allocation3 [shape = 's32[1]{0}', space=sflag, size = 0x4, scoped, tag = 'scoped memory for tpu_custom_call.1']
    %8 = vsyncpa [#allocation3], 0
    // Predicated region
    $region2: #{tpu_custom_call.1} parent=1 // pred_check
      _
    $region3: #{tpu_custom_call.1} parent=1 // pred_check_branch
      %10 = sbr.rel (0) target = $region5
    $region4: #{tpu_custom_call.1} parent=1 // pred_region
      _
    $region5: #{tpu_custom_call.1} parent=1 // pred_fallthru
      _
    // Predicated region
    $region6: #{tpu_custom_call.1} parent=1 // pred_check
      _
    $region7: #{tpu_custom_call.1} parent=1 // pred_check_branch
      %12 = sbr.rel (0) target = $region9
    $region8: #{tpu_custom_call.1} parent=1 // pred_region
      _
    $region9: #{tpu_custom_call.1} parent=1 // pred_fallthru
      _
    // Predicated region
    $region10: #{tpu_custom_call.1} parent=1 // pred_check
      _
    $region11: #{tpu_custom_call.1} parent=1 // pred_check_branch
      %14 = sbr.rel (0) target = $region13
    $region12: #{tpu_custom_call.1} parent=1 // pred_region
      _
    $region13: #{tpu_custom_call.1} parent=1 // pred_fallthru
      _
    %v15 = vld [vmem:[%s0] sm:$0x1]
    %v16 = vld [vmem:[%s0 + $0x1] sm:$0x1]
    %v17 = vld [vmem:[%s1] sm:$0xff]
    %v18 = vld [vmem:[%s1 + $0x8] sm:$0xff]
    %v19 = vld [vmem:[%s1 + $0x10] sm:$0xff]
    %v20 = vld [vmem:[%s1 + $0x18] sm:$0xff]
    %v21 = vld [vmem:[%s1 + $0x20] sm:$0xff]
    %v22 = vld [vmem:[%s1 + $0x28] sm:$0xff]
    %v23 = vld [vmem:[%s1 + $0x30] sm:$0xff]
    %v24 = vld [vmem:[%s1 + $0x38] sm:$0xff]
    %v25 = vld [vmem:[%s1 + $0x40] sm:$0xff]
    %v26 = vld [vmem:[%s1 + $0x48] sm:$0xff]
    %v27 = vld [vmem:[%s1 + $0x50] sm:$0xff]
    %v28 = vld [vmem:[%s1 + $0x58] sm:$0xff]
    %v29 = vld [vmem:[%s1 + $0x60] sm:$0xff]
    %v30 = vld [vmem:[%s1 + $0x68] sm:$0xff]
    %v31 = vld [vmem:[%s1 + $0x70] sm:$0xff]
    %v32 = vld [vmem:[%s1 + $0x78] sm:$0xff]
    %v33 = vld [vmem:[%s1 + $0x80] sm:$0xff]
    %v34 = vld [vmem:[%s1 + $0x88] sm:$0xff]
    %v35 = vld [vmem:[%s1 + $0x90] sm:$0xff]
    %v36 = vld [vmem:[%s1 + $0x98] sm:$0xff]
    %37 = vset.pattern.permute.xlu0 0
    %38 = vperm.xlu0 %37, %v17
    %v39 = vpop.permute.xlu0 %38
    %40 = vset.pattern.permute.xlu0 0
    %41 = vperm.xlu0 %40, %v18
    %v42 = vpop.permute.xlu0 %41
    %43 = vset.pattern.permute.xlu0 0
    %44 = vperm.xlu0 %43, %v19
    %v45 = vpop.permute.xlu0 %44
    %46 = vset.pattern.permute.xlu0 0
    %47 = vperm.xlu0 %46, %v20
    %v48 = vpop.permute.xlu0 %47
    %49 = vset.pattern.permute.xlu0 0
    %50 = vperm.xlu0 %49, %v21
    %v51 = vpop.permute.xlu0 %50
    %52 = vset.pattern.permute.xlu0 0
    %53 = vperm.xlu0 %52, %v22
    %v54 = vpop.permute.xlu0 %53
    %55 = vset.pattern.permute.xlu0 0
    %56 = vperm.xlu0 %55, %v23
    %v57 = vpop.permute.xlu0 %56
    %58 = vset.pattern.permute.xlu0 0
    %59 = vperm.xlu0 %58, %v24
    %v60 = vpop.permute.xlu0 %59
    %61 = vset.pattern.permute.xlu0 0
    %62 = vperm.xlu0 %61, %v25
    %v63 = vpop.permute.xlu0 %62
    %64 = vset.pattern.permute.xlu0 0
    %65 = vperm.xlu0 %64, %v26
    %v66 = vpop.permute.xlu0 %65
    %67 = vset.pattern.permute.xlu0 0
    %68 = vperm.xlu0 %67, %v27
    %v69 = vpop.permute.xlu0 %68
    %70 = vset.pattern.permute.xlu0 0
    %71 = vperm.xlu0 %70, %v28
    %v72 = vpop.permute.xlu0 %71
    %73 = vset.pattern.permute.xlu0 0
    %74 = vperm.xlu0 %73, %v29
    %v75 = vpop.permute.xlu0 %74
    %76 = vset.pattern.permute.xlu0 0
    %77 = vperm.xlu0 %76, %v30
    %v78 = vpop.permute.xlu0 %77
    %79 = vset.pattern.permute.xlu0 0
    %80 = vperm.xlu0 %79, %v31
    %v81 = vpop.permute.xlu0 %80
    %82 = vset.pattern.permute.xlu0 0
    %83 = vperm.xlu0 %82, %v32
    %v84 = vpop.permute.xlu0 %83
    %85 = vset.pattern.permute.xlu0 0
    %86 = vperm.xlu0 %85, %v33
    %v87 = vpop.permute.xlu0 %86
    %88 = vset.pattern.permute.xlu0 0
    %89 = vperm.xlu0 %88, %v34
    %v90 = vpop.permute.xlu0 %89
    %91 = vset.pattern.permute.xlu0 0
    %92 = vperm.xlu0 %91, %v35
    %v93 = vpop.permute.xlu0 %92
    %94 = vset.pattern.permute.xlu0 0
    %95 = vperm.xlu0 %94, %v36
    %v96 = vpop.permute.xlu0 %95
    %v97 = vperm.slane %v15, 0
    %vm98 = vcmp.eq.s32.totalorder %v39, %v97
    %vm99 = vcmp.eq.s32.totalorder %v42, %v97
    %vm100 = vcmp.eq.s32.totalorder %v45, %v97
    %vm101 = vcmp.eq.s32.totalorder %v48, %v97
    %vm102 = vcmp.eq.s32.totalorder %v51, %v97
    %vm103 = vcmp.eq.s32.totalorder %v54, %v97
    %vm104 = vcmp.eq.s32.totalorder %v57, %v97
    %vm105 = vcmp.eq.s32.totalorder %v60, %v97
    %vm106 = vcmp.eq.s32.totalorder %v63, %v97
    %vm107 = vcmp.eq.s32.totalorder %v66, %v97
    %vm108 = vcmp.eq.s32.totalorder %v69, %v97
    %vm109 = vcmp.eq.s32.totalorder %v72, %v97
    %vm110 = vcmp.eq.s32.totalorder %v75, %v97
    %vm111 = vcmp.eq.s32.totalorder %v78, %v97
    %vm112 = vcmp.eq.s32.totalorder %v81, %v97
    %vm113 = vcmp.eq.s32.totalorder %v84, %v97
    %vm114 = vcmp.eq.s32.totalorder %v87, %v97
    %vm115 = vcmp.eq.s32.totalorder %v90, %v97
    %vm116 = vcmp.eq.s32.totalorder %v93, %v97
    %vm117 = vcmp.eq.s32.totalorder %v96, %v97
    %v118 = vperm.slane %v16, 0
    %vm119 = vcmp.eq.s32.totalorder %v39, %v118
    %vm120 = vcmp.eq.s32.totalorder %v42, %v118
    %vm121 = vcmp.eq.s32.totalorder %v45, %v118
    %vm122 = vcmp.eq.s32.totalorder %v48, %v118
    %vm123 = vcmp.eq.s32.totalorder %v51, %v118
    %vm124 = vcmp.eq.s32.totalorder %v54, %v118
    %vm125 = vcmp.eq.s32.totalorder %v57, %v118
    %vm126 = vcmp.eq.s32.totalorder %v60, %v118
    %vm127 = vcmp.eq.s32.totalorder %v63, %v118
    %vm128 = vcmp.eq.s32.totalorder %v66, %v118
    %vm129 = vcmp.eq.s32.totalorder %v69, %v118
    %vm130 = vcmp.eq.s32.totalorder %v72, %v118
    %vm131 = vcmp.eq.s32.totalorder %v75, %v118
    %vm132 = vcmp.eq.s32.totalorder %v78, %v118
    %vm133 = vcmp.eq.s32.totalorder %v81, %v118
    %vm134 = vcmp.eq.s32.totalorder %v84, %v118
    %vm135 = vcmp.eq.s32.totalorder %v87, %v118
    %vm136 = vcmp.eq.s32.totalorder %v90, %v118
    %vm137 = vcmp.eq.s32.totalorder %v93, %v118
    %vm138 = vcmp.eq.s32.totalorder %v96, %v118
    %vm139 = vmor %vm98, %vm119
    %vm140 = vmor %vm99, %vm120
    %vm141 = vmor %vm100, %vm121
    %vm142 = vmor %vm101, %vm122
    %vm143 = vmor %vm102, %vm123
    %vm144 = vmor %vm103, %vm124
    %vm145 = vmor %vm104, %vm125
    %vm146 = vmor %vm105, %vm126
    %vm147 = vmor %vm106, %vm127
    %vm148 = vmor %vm107, %vm128
    %vm149 = vmor %vm108, %vm129
    %vm150 = vmor %vm109, %vm130
    %vm151 = vmor %vm110, %vm131
    %vm152 = vmor %vm111, %vm132
    %vm153 = vmor %vm112, %vm133
    %vm154 = vmor %vm113, %vm134
    %vm155 = vmor %vm114, %vm135
    %vm156 = vmor %vm115, %vm136
    %vm157 = vmor %vm116, %vm137
    %vm158 = vmor %vm117, %vm138
    %v159 = vsel %vm139, 1, 0
    %v160 = vsel %vm140, 1, 0
    %v161 = vsel %vm141, 1, 0
    %v162 = vsel %vm142, 1, 0
    %v163 = vsel %vm143, 1, 0
    %v164 = vsel %vm144, 1, 0
    %v165 = vsel %vm145, 1, 0
    %v166 = vsel %vm146, 1, 0
    %v167 = vsel %vm147, 1, 0
    %v168 = vsel %vm148, 1, 0
    %v169 = vsel %vm149, 1, 0
    %v170 = vsel %vm150, 1, 0
    %v171 = vsel %vm151, 1, 0
    %v172 = vsel %vm152, 1, 0
    %v173 = vsel %vm153, 1, 0
    %v174 = vsel %vm154, 1, 0
    %v175 = vsel %vm155, 1, 0
    %v176 = vsel %vm156, 1, 0
    %v177 = vsel %vm157, 1, 0
    %v178 = vsel %vm158, 1, 0
    %v179 = vcvt.s32.f32 %v159
    %v180 = vcvt.s32.f32 %v160
    %v181 = vcvt.s32.f32 %v161
    %v182 = vcvt.s32.f32 %v162
    %v183 = vcvt.s32.f32 %v163
    %v184 = vcvt.s32.f32 %v164
    %v185 = vcvt.s32.f32 %v165
    %v186 = vcvt.s32.f32 %v166
    %v187 = vcvt.s32.f32 %v167
    %v188 = vcvt.s32.f32 %v168
    %v189 = vcvt.s32.f32 %v169
    %v190 = vcvt.s32.f32 %v170
    %v191 = vcvt.s32.f32 %v171
    %v192 = vcvt.s32.f32 %v172
    %v193 = vcvt.s32.f32 %v173
    %v194 = vcvt.s32.f32 %v174
    %v195 = vcvt.s32.f32 %v175
    %v196 = vcvt.s32.f32 %v176
    %v197 = vcvt.s32.f32 %v177
    %v198 = vcvt.s32.f32 %v178
    %v199 = vld [vmem:[%s2] sm:$0xff]
    %v200 = vld [vmem:[%s2 + $0x8] sm:$0xff]
    %v201 = vld [vmem:[%s2 + $0x10] sm:$0xff]
    %v202 = vld [vmem:[%s2 + $0x18] sm:$0xff]
    %v203 = vld [vmem:[%s2 + $0x20] sm:$0xff]
    %v204 = vld [vmem:[%s2 + $0x28] sm:$0xff]
    %v205 = vld [vmem:[%s2 + $0x30] sm:$0xff]
    %v206 = vld [vmem:[%s2 + $0x38] sm:$0xff]
    %vm207 = vcmask 261120
    %v209 = vsel %vm207, %v200, 0
    %v212 = vsel %vm207, %v202, 0
    %v215 = vsel %vm207, %v204, 0
    %v218 = vsel %vm207, %v206, 0
    %220 = vmatpush.msra.mxu0 %v194
    %221 = vmatpush.msra.mxu0 %v193
    %222 = vmatpush.msra.mxu0 %v192
    %223 = vmatpush.msra.mxu0 %v191
    %224 = vmatpush.msra.mxu0 %v190
    %225 = vmatpush.msra.mxu0 %v189
    %226 = vmatpush.msra.mxu0 %v188
    %227 = vmatpush.msra.mxu0 %v187
    %228 = vmatpush.msra.mxu0 %v186
    %229 = vmatpush.msra.mxu0 %v185
    %230 = vmatpush.msra.mxu0 %v184
    %231 = vmatpush.msra.mxu0 %v183
    %232 = vmatpush.msra.mxu0 %v182
    %233 = vmatpush.msra.mxu0 %v181
    %234 = vmatpush.msra.mxu0 %v180
    %235 = vmatpush.msra.mxu0 %v179
    %236 = vmatmul.f32.gmra.mxu0 %v199
    %v237 = vpop.f32.mrf.mxu0
    %v238 = vadd.f32 0.0, %v237
    %239 = vmatmul.f32.gmra.mxu0 %v201
    %v240 = vpop.f32.mrf.mxu0
    %v241 = vadd.f32 0.0, %v240
    %242 = vmatmul.f32.gmra.mxu0 %v203
    %v243 = vpop.f32.mrf.mxu0
    %v244 = vadd.f32 0.0, %v243
    %245 = vmatmul.f32.gmra.mxu0 %v205
    %v246 = vpop.f32.mrf.mxu0
    %v247 = vadd.f32 0.0, %v246
    %248 = vdwg.mxu0
    %249 = vmatpush.msra.mxu0 0.0
    %250 = vmatpush.msra.mxu0 0.0
    %251 = vmatpush.msra.mxu0 0.0
    %252 = vmatpush.msra.mxu0 0.0
    %253 = vmatpush.msra.mxu0 0.0
    %254 = vmatpush.msra.mxu0 0.0
    %255 = vmatpush.msra.mxu0 0.0
    %256 = vmatpush.msra.mxu0 0.0
    %257 = vmatpush.msra.mxu0 0.0
    %258 = vmatpush.msra.mxu0 0.0
    %259 = vmatpush.msra.mxu0 0.0
    %260 = vmatpush.msra.mxu0 0.0
    %261 = vmatpush.msra.mxu0 %v198
    %262 = vmatpush.msra.mxu0 %v197
    %263 = vmatpush.msra.mxu0 %v196
    %264 = vmatpush.msra.mxu0 %v195
    %265 = vmatmul.f32.gmra.mxu0 %v209
    %v266 = vpop.f32.mrf.mxu0
    %v267 = vadd.f32 %v238, %v266
    %268 = vmatmul.f32.gmra.mxu0 %v212
    %v269 = vpop.f32.mrf.mxu0
    %v270 = vadd.f32 %v241, %v269
    %271 = vmatmul.f32.gmra.mxu0 %v215
    %v272 = vpop.f32.mrf.mxu0
    %v273 = vadd.f32 %v244, %v272
    %274 = vmatmul.f32.gmra.mxu0 %v218
    %v275 = vpop.f32.mrf.mxu0
    %v276 = vadd.f32 %v247, %v275
    %277 = vdwg.mxu0
    %v278 = vmul.f32 %v267, %v273
    %v279 = vmul.f32 %v270, %v276
    %v280 = vadd.f32 %v278, %v279
    %v281 = vrot.slane %v280, 4
    %v282 = vadd.f32 %v280, %v281
    %v283 = vrot.slane %v282, 2
    %v284 = vadd.f32 %v282, %v283
    %v285 = vrot.slane %v284, 1
    %v286 = vadd.f32 %v284, %v285
    %v287 = vxor.u32 %v286, 2147483648
    %v288 = vmul.f32 %v287, 1.442695
    %v289 = vpow.pop %v288
    %v290 = vadd.f32 %v289, 1.0
    %v291 = vrcp.pop %v290
    %v292 = vmul.f32 %v290, %v291
    %v293 = vsub.f32 1.0, %v292
    %v294 = vmul.f32 %v291, %v293
    %v295 = vadd.f32 %v291, %v294
    %vm296 = vweird.f32 %v290
    %vm297 = vweird.f32 %v291
    %vm298 = vmor %vm296, %vm297
    %v299 = vsel %vm298, %v291, %v295
    %v300 = vand.u32 2147483647, %v290
    %vm301 = vcmp.eq.f32.partialorder %v300, 8.507059e+37
    %v302 = vand.u32 %v290, 2147483648
    %v303 = vor.u32 1.1754944e-38, %v302
    %v304 = vsel %vm301, %v303, %v299
    %v305 = vmul.f32 1.0, %v304
    %306 = vst [vmem:[#allocation2] sm:$0x1] %v305
    // Predicated region
    $region14: #{tpu_custom_call.1} parent=1 // pred_check
      _
    $region15: #{tpu_custom_call.1} parent=1 // pred_check_branch
      %308 = sbr.rel (0) target = $region17
    $region16: #{tpu_custom_call.1} parent=1 // pred_region
      %310 = vsyncadd [#allocation3], 0
      %s312 = sshll.u32 [#allocation2], 4
      %s313 = int_to_ptr.vmem [resolvable:$true] %s312
      %s314 = sshll.u32 %s3, 4
      %s315 = int_to_ptr.hbm [resolvable:$true] %s314
      %317 = dma.vmem_to_hbm [thread:$0]  %s313, 16, %s315, [#allocation3]
    $region17: #{tpu_custom_call.1} parent=1 // pred_fallthru
      _
    // Predicated region
    $region18: #{tpu_custom_call.1} parent=1 // pred_check
      _
    $region19: #{tpu_custom_call.1} parent=1 // pred_check_branch
      %319 = sbr.rel (0) target = $region21
    $region20: #{tpu_custom_call.1} parent=1 // pred_region
      %321 = dma.done [#allocation3], 16
    $region21: #{tpu_custom_call.1} parent=1 // pred_fallthru
      _
    %322 = vsyncpa [#allocation3], 1

</llo_original>
